<compile_context>
chip_gen: v7x
topology: tpu7x:2x2x1
jax: 0.10.0
libtpu: 0.0.40
codegen_flags: <defaults>
</compile_context>

<pallas_src>
import jax
import jax.numpy as jnp
import numpy as np
from jax.experimental import pallas as pl
from jax.experimental.pallas import tpu as pltpu


def _round_up(x, m):
    return ((x + m - 1) // m) * m


def _mycdm_msa_kernel(pos_ref, neg_ref,
                      a_ref, bm_ref, c_ref,
                      w2_ref, b2_ref, w3_ref, b3_ref,
                      out_ref):
    """One batch tile: folded 1-token attention + prednet MLP."""
    # bf16 MXU inputs, f32 accumulation.
    up = pos_ref[...].astype(jnp.bfloat16)
    un = neg_ref[...].astype(jnp.bfloat16)

    # h1 = sigmoid(cat([attn_pos, attn_neg]) @ W1 + b1), with the attention
    # value/out projections folded into A / Bm / c offline (exact up to fp
    # reassociation; fold done in float64).
    h1 = jax.nn.sigmoid(
        jnp.dot(up, a_ref[...], preferred_element_type=jnp.float32)
        + jnp.dot(un, bm_ref[...], preferred_element_type=jnp.float32)
        + c_ref[...])                                                   # [tb, 2D]

    h2 = jax.nn.sigmoid(
        jnp.dot(h1.astype(jnp.bfloat16), w2_ref[...],
                preferred_element_type=jnp.float32)
        + b2_ref[...])                                                  # [tb, D]

    # Final Linear(D, 1) on the VPU/XLU (mul + lane reduce), no N=1 MXU pass.
    # Dropout(p=0.5) layers are identity in eval mode.
    logits = jnp.sum(h2 * w3_ref[...], axis=-1, keepdims=True) + b3_ref[...]
    out_ref[...] = jax.nn.sigmoid(logits)                               # [tb, 1]


def fold_params(raw):
    """Offline (host-side, float64) fold of the attention projections into the
    first prednet layer.  Call once, outside jit."""
    f64 = lambda x: np.asarray(x, dtype=np.float64)
    D = raw["wv"].shape[0]
    wv, bv = f64(raw["wv"]), f64(raw["bv"])
    wo, bo = f64(raw["wo"]), f64(raw["bo"])
    w1, b1 = f64(raw["w1"]), f64(raw["b1"])

    wvo = wv @ wo                         # [D, D]   value->out chain
    bvo = bv @ wo + bo                    # [1, D]   folded attention bias
    A = wvo @ w1[:D, :]                   # [D, 2D]  pos branch into W1
    Bm = wvo @ w1[D:2 * D, :]             # [D, 2D]  neg branch into W1
    c = bvo @ (w1[:D, :] + w1[D:2 * D, :]) + b1   # [1, 2D]

    return dict(
        bert=raw["bert"], stu_pos=raw["stu_pos"], stu_neg=raw["stu_neg"],
        A=jnp.asarray(A, jnp.bfloat16),
        Bm=jnp.asarray(Bm, jnp.bfloat16),
        c=jnp.asarray(c, jnp.float32),
        w2=jnp.asarray(raw["w2"], jnp.bfloat16),
        b2=jnp.asarray(raw["b2"], jnp.float32),
        w3=jnp.asarray(raw["w3"], jnp.float32),
        b3=jnp.asarray(raw["b3"], jnp.float32))


def mycdm_msa_forward(stu_ids, exer_in, params, *, tb=256):
    """Returns (output[B], exer_emb[B,D], u_pos[B,D], u_neg[B,D])."""
    # Embedding gathers in plain JAX.  These rows are the module's *return
    # values* so they are materialized in HBM regardless; nothing is routed
    # through the kernel redundantly.
    exer_emb = params["bert"][exer_in]   # query of a 1-token attention:
                                         # cancels out of the prediction.
    u_pos = params["stu_pos"][stu_ids]
    u_neg = params["stu_neg"][stu_ids]

    A, Bm, c = params["A"], params["Bm"], params["c"]
    w2, b2 = params["w2"], params["b2"]
    w3, b3 = params["w3"], params["b3"]

    B, D = u_pos.shape
    # Batch tile: multiple of 16 (bf16 sublane packing); default 256 rows so
    # realistic batches give many "parallel" grid steps (v7x megacore) while
    # the per-tile working set stays far under VMEM.  Ragged last block is
    # handled by masked output writeback.
    TB = min(tb, _round_up(B, 16))
    grid = (pl.cdiv(B, TB),)

    row = pl.BlockSpec((TB, D), lambda i: (i, 0))
    # Weight blocks have a constant block index -> fetched once by the
    # pipeline.  (pipeline_mode=pl.Buffered(1) would additionally single-buffer
    # them; not needed since the bf16-folded weights fit comfortably.)
    full = lambda arr: pl.BlockSpec(arr.shape, lambda i: (0,) * arr.ndim)

    out = pl.pallas_call(
        _mycdm_msa_kernel,
        out_shape=jax.ShapeDtypeStruct((B, 1), jnp.float32),
        grid=grid,
        in_specs=[row, row,
                  full(A), full(Bm), full(c),
                  full(w2), full(b2), full(w3), full(b3)],
        out_specs=pl.BlockSpec((TB, 1), lambda i: (i, 0)),
        compiler_params=pltpu.CompilerParams(
            dimension_semantics=("parallel",),
            vmem_limit_bytes=32 * 1024 * 1024),
    )(u_pos, u_neg, A, Bm, c, w2, b2, w3, b3)

    return out[:, 0], exer_emb, u_pos, u_neg


def init_params(key, num_students, num_exercises, d_model):
    """Synthetic parameters mirroring MyCDM_MSA.__init__ (bert_model_name=None
    branch: a frozen nn.Embedding exercise table instead of BERT / .npy)."""
    keys = jax.random.split(key, 8)
    D = d_model

    def xavier(k_, fan_in, fan_out, shape=None):
        bound = (6.0 / (fan_in + fan_out)) ** 0.5
        shape = (fan_in, fan_out) if shape is None else shape
        return jax.random.uniform(k_, shape, jnp.float32, -bound, bound)

    # bert: nn.Embedding(num_exercises, D) with normal(0, 0.1); frozen.
    bert = 0.1 * jax.random.normal(keys[0], (num_exercises, D), jnp.float32)
    # student embeddings: normal(0, 0.15) per initialize().
    stu_pos = 0.15 * jax.random.normal(keys[1], (num_students, D), jnp.float32)
    stu_neg = 0.15 * jax.random.normal(keys[2], (num_students, D), jnp.float32)

    # attn_pos (nn.MultiheadAttention): with 1-token sequences only the value
    # slice of in_proj and out_proj reach the output.  Stored [in, out].
    # Xavier bounds match PyTorch's fan computation on in_proj_weight [3D, D]
    # and out_proj.weight [D, D]; biases are zero.
    wv = xavier(keys[3], 3 * D, D, shape=(D, D))
    bv = jnp.zeros((1, D), jnp.float32)
    wo = xavier(keys[4], D, D)
    bo = jnp.zeros((1, D), jnp.float32)
    # TODO(synk): attn_neg is declared in the module but never used by forward
    # (the reference calls self.attn_pos for both branches), so no params here.

    # prednet linears ([in, out]; w3 kept as the native [1, D] row).
    w1 = xavier(keys[5], 2 * D, 2 * D); b1 = jnp.zeros((1, 2 * D), jnp.float32)
    w2 = xavier(keys[6], 2 * D, D);     b2 = jnp.zeros((1, D), jnp.float32)
    w3 = xavier(keys[7], D, 1, shape=(1, D)); b3 = jnp.zeros((1, 1), jnp.float32)

    return dict(bert=bert, stu_pos=stu_pos, stu_neg=stu_neg,
                wv=wv, bv=bv, wo=wo, bo=bo,
                w1=w1, b1=b1, w2=w2, b2=b2, w3=w3, b3=b3)


def _reference_forward(stu_ids, raw):
    """Unfolded f32 reference of the prediction path (eval-mode dropout)."""
    u_pos = raw["stu_pos"][stu_ids]
    u_neg = raw["stu_neg"][stu_ids]
    attn = lambda x: (x @ raw["wv"] + raw["bv"]) @ raw["wo"] + raw["bo"]
    h = jnp.concatenate([attn(u_pos), attn(u_neg)], axis=1)
    h1 = jax.nn.sigmoid(h @ raw["w1"] + raw["b1"])
    h2 = jax.nn.sigmoid(h1 @ raw["w2"] + raw["b2"])
    logits = h2 @ raw["w3"].T + raw["b3"]
    return jax.nn.sigmoid(logits)[:, 0]


if __name__ == "__main__":
    num_students, num_exercises, d_model = 50, 64, 32   # small demo shapes
    B = 8

    root = jax.random.PRNGKey(0)
    kp, k1, k2 = jax.random.split(root, 3)
    raw = init_params(kp, num_students, num_exercises, d_model)
    params = fold_params(raw)                 # once, host-side, float64 fold
    stu_ids = jax.random.randint(k1, (B,), 0, num_students)
    exer_in = jax.random.randint(k2, (B,), 0, num_exercises)

    fwd = jax.jit(mycdm_msa_forward)
    output, exer_emb, u_pos, u_neg = fwd(stu_ids, exer_in, params)
    jax.block_until_ready((output, exer_emb, u_pos, u_neg))

    assert output.shape == (B,)
    assert exer_emb.shape == (B, d_model)
    assert u_pos.shape == (B, d_model)
    assert u_neg.shape == (B, d_model)
    assert bool(jnp.all(jnp.isfinite(output)))
    assert bool(jnp.all((output > 0.0) & (output < 1.0)))

    # Parity vs. the unfolded f32 reference (bf16 weights -> loose tolerance).
    ref = _reference_forward(stu_ids, raw)
    assert bool(jnp.allclose(output, ref, atol=2e-2))
    assert bool(jnp.allclose(u_pos, raw["stu_pos"][stu_ids]))
    assert bool(jnp.allclose(exer_emb, raw["bert"][exer_in]))

    print("KERNEL_OK")
</pallas_src>

<mosaic_0001>
module attributes {stable_mosaic.version = 11 : i64} {
  func.func @_mycdm_msa_kernel(%arg0: i32, %arg1: memref<16x32xf32, #tpu.memory_space<vmem>>, %arg2: memref<16x32xf32, #tpu.memory_space<vmem>>, %arg3: memref<32x64xbf16, #tpu.memory_space<vmem>>, %arg4: memref<32x64xbf16, #tpu.memory_space<vmem>>, %arg5: memref<1x64xf32, #tpu.memory_space<vmem>>, %arg6: memref<64x32xbf16, #tpu.memory_space<vmem>>, %arg7: memref<1x32xf32, #tpu.memory_space<vmem>>, %arg8: memref<1x32xf32, #tpu.memory_space<vmem>>, %arg9: memref<1x1xf32, #tpu.memory_space<vmem>>, %arg10: memref<16x1xf32, #tpu.memory_space<vmem>>) attributes {dimension_semantics = [#tpu.dimension_semantics<parallel>], iteration_bounds = array<i64: 1>, scalar_prefetch = 0 : i64, scratch_operands = 0 : i64, tpu.core_type = #tpu.core_type<tc>, window_params = [{transform_indices = @transform_0, window_bounds = array<i64: 16, 32>}, {transform_indices = @transform_1, window_bounds = array<i64: 16, 32>}, {pipeline_mode = #tpu.pipeline_mode<synchronous>, transform_indices = @transform_2, window_bounds = array<i64: 32, 64>}, {pipeline_mode = #tpu.pipeline_mode<synchronous>, transform_indices = @transform_3, window_bounds = array<i64: 32, 64>}, {pipeline_mode = #tpu.pipeline_mode<synchronous>, transform_indices = @transform_4, window_bounds = array<i64: 1, 64>}, {pipeline_mode = #tpu.pipeline_mode<synchronous>, transform_indices = @transform_5, window_bounds = array<i64: 64, 32>}, {pipeline_mode = #tpu.pipeline_mode<synchronous>, transform_indices = @transform_6, window_bounds = array<i64: 1, 32>}, {pipeline_mode = #tpu.pipeline_mode<synchronous>, transform_indices = @transform_7, window_bounds = array<i64: 1, 32>}, {pipeline_mode = #tpu.pipeline_mode<synchronous>, transform_indices = @transform_8, window_bounds = array<i64: 1, 1>}, {transform_indices = @transform_9, window_bounds = array<i64: 16, 1>}]} {
    %c0 = arith.constant 0 : index
    %c0_0 = arith.constant 0 : index
    %0 = vector.load %arg1[%c0, %c0_0] : memref<16x32xf32, #tpu.memory_space<vmem>>, vector<16x32xf32>
    %1 = arith.truncf %0 : vector<16x32xf32> to vector<16x32xbf16>
    %c0_1 = arith.constant 0 : index
    %c0_2 = arith.constant 0 : index
    %2 = vector.load %arg2[%c0_1, %c0_2] : memref<16x32xf32, #tpu.memory_space<vmem>>, vector<16x32xf32>
    %3 = arith.truncf %2 : vector<16x32xf32> to vector<16x32xbf16>
    %c0_3 = arith.constant 0 : index
    %c0_4 = arith.constant 0 : index
    %4 = vector.load %arg3[%c0_3, %c0_4] : memref<32x64xbf16, #tpu.memory_space<vmem>>, vector<32x64xbf16>
    %cst = arith.constant dense<0.000000e+00> : vector<16x64xf32>
    %5 = tpu.matmul %1, %4, %cst {dimension_numbers = #tpu.dot_dimension_numbers<[1], [0], [0], [1], [0, 0, 1, 1], [], []>} : vector<16x32xbf16>, vector<32x64xbf16>, vector<16x64xf32> -> vector<16x64xf32>
    %c0_5 = arith.constant 0 : index
    %c0_6 = arith.constant 0 : index
    %6 = vector.load %arg4[%c0_5, %c0_6] : memref<32x64xbf16, #tpu.memory_space<vmem>>, vector<32x64xbf16>
    %cst_7 = arith.constant dense<0.000000e+00> : vector<16x64xf32>
    %7 = tpu.matmul %3, %6, %cst_7 {dimension_numbers = #tpu.dot_dimension_numbers<[1], [0], [0], [1], [0, 0, 1, 1], [], []>} : vector<16x32xbf16>, vector<32x64xbf16>, vector<16x64xf32> -> vector<16x64xf32>
    %8 = arith.addf %5, %7 : vector<16x64xf32>
    %c0_8 = arith.constant 0 : index
    %c0_9 = arith.constant 0 : index
    %9 = vector.load %arg5[%c0_8, %c0_9] : memref<1x64xf32, #tpu.memory_space<vmem>>, vector<1x64xf32>
    %10 = vector.broadcast %9 : vector<1x64xf32> to vector<16x64xf32>
    %11 = arith.addf %8, %10 : vector<16x64xf32>
    %12 = arith.negf %11 : vector<16x64xf32>
    %13 = math.exp %12 : vector<16x64xf32>
    %cst_10 = arith.constant 1.000000e+00 : f32
    %14 = vector.broadcast %cst_10 : f32 to vector<16x64xf32>
    %15 = arith.addf %14, %13 : vector<16x64xf32>
    %16 = arith.divf %14, %15 : vector<16x64xf32>
    %17 = arith.truncf %16 : vector<16x64xf32> to vector<16x64xbf16>
    %c0_11 = arith.constant 0 : index
    %c0_12 = arith.constant 0 : index
    %18 = vector.load %arg6[%c0_11, %c0_12] : memref<64x32xbf16, #tpu.memory_space<vmem>>, vector<64x32xbf16>
    %cst_13 = arith.constant dense<0.000000e+00> : vector<16x32xf32>
    %19 = tpu.matmul %17, %18, %cst_13 {dimension_numbers = #tpu.dot_dimension_numbers<[1], [0], [0], [1], [0, 0, 1, 1], [], []>} : vector<16x64xbf16>, vector<64x32xbf16>, vector<16x32xf32> -> vector<16x32xf32>
    %c0_14 = arith.constant 0 : index
    %c0_15 = arith.constant 0 : index
    %20 = vector.load %arg7[%c0_14, %c0_15] : memref<1x32xf32, #tpu.memory_space<vmem>>, vector<1x32xf32>
    %21 = vector.broadcast %20 : vector<1x32xf32> to vector<16x32xf32>
    %22 = arith.addf %19, %21 : vector<16x32xf32>
    %23 = arith.negf %22 : vector<16x32xf32>
    %24 = math.exp %23 : vector<16x32xf32>
    %cst_16 = arith.constant 1.000000e+00 : f32
    %25 = vector.broadcast %cst_16 : f32 to vector<16x32xf32>
    %26 = arith.addf %25, %24 : vector<16x32xf32>
    %27 = arith.divf %25, %26 : vector<16x32xf32>
    %c0_17 = arith.constant 0 : index
    %c0_18 = arith.constant 0 : index
    %28 = vector.load %arg8[%c0_17, %c0_18] : memref<1x32xf32, #tpu.memory_space<vmem>>, vector<1x32xf32>
    %29 = vector.broadcast %28 : vector<1x32xf32> to vector<16x32xf32>
    %30 = arith.mulf %27, %29 : vector<16x32xf32>
    %cst_19 = arith.constant dense<0.000000e+00> : vector<16xf32>
    %31 = vector.multi_reduction <add>, %30, %cst_19 [1] : vector<16x32xf32> to vector<16xf32>
    %32 = vector.shape_cast %31 : vector<16xf32> to vector<16x1xf32>
    %c0_20 = arith.constant 0 : index
    %c0_21 = arith.constant 0 : index
    %33 = vector.load %arg9[%c0_20, %c0_21] : memref<1x1xf32, #tpu.memory_space<vmem>>, vector<1x1xf32>
    %34 = vector.broadcast %33 : vector<1x1xf32> to vector<16x1xf32>
    %35 = arith.addf %32, %34 : vector<16x1xf32>
    %36 = arith.negf %35 : vector<16x1xf32>
    %37 = math.exp %36 : vector<16x1xf32>
    %cst_22 = arith.constant 1.000000e+00 : f32
    %38 = vector.broadcast %cst_22 : f32 to vector<16x1xf32>
    %39 = arith.addf %38, %37 : vector<16x1xf32>
    %40 = arith.divf %38, %39 : vector<16x1xf32>
    %c0_23 = arith.constant 0 : index
    %c0_24 = arith.constant 0 : index
    %41 = vector.load %arg10[%c0_23, %c0_24] : memref<16x1xf32, #tpu.memory_space<vmem>>, vector<16x1xf32>
    tpu.vector_store %arg10[%c0_23, %c0_24], %40 {strides = array<i32>} : memref<16x1xf32, #tpu.memory_space<vmem>>, vector<16x1xf32>,
    return
  }
  func.func @transform_0(%arg0: i32) -> (i32, i32) {
    %c0_i32 = arith.constant 0 : i32
    %c0_i32_0 = arith.constant 0 : i32
    return %arg0, %c0_i32 : i32, i32
  }
  func.func @transform_1(%arg0: i32) -> (i32, i32) {
    %c0_i32 = arith.constant 0 : i32
    %c0_i32_0 = arith.constant 0 : i32
    return %arg0, %c0_i32 : i32, i32
  }
  func.func @transform_2(%arg0: i32) -> (i32, i32) {
    %c0_i32 = arith.constant 0 : i32
    %c0_i32_0 = arith.constant 0 : i32
    %c0_i32_1 = arith.constant 0 : i32
    return %c0_i32, %c0_i32_0 : i32, i32
  }
  func.func @transform_3(%arg0: i32) -> (i32, i32) {
    %c0_i32 = arith.constant 0 : i32
    %c0_i32_0 = arith.constant 0 : i32
    %c0_i32_1 = arith.constant 0 : i32
    return %c0_i32, %c0_i32_0 : i32, i32
  }
  func.func @transform_4(%arg0: i32) -> (i32, i32) {
    %c0_i32 = arith.constant 0 : i32
    %c0_i32_0 = arith.constant 0 : i32
    %c0_i32_1 = arith.constant 0 : i32
    return %c0_i32, %c0_i32_0 : i32, i32
  }
  func.func @transform_5(%arg0: i32) -> (i32, i32) {
    %c0_i32 = arith.constant 0 : i32
    %c0_i32_0 = arith.constant 0 : i32
    %c0_i32_1 = arith.constant 0 : i32
    return %c0_i32, %c0_i32_0 : i32, i32
  }
  func.func @transform_6(%arg0: i32) -> (i32, i32) {
    %c0_i32 = arith.constant 0 : i32
    %c0_i32_0 = arith.constant 0 : i32
    %c0_i32_1 = arith.constant 0 : i32
    return %c0_i32, %c0_i32_0 : i32, i32
  }
  func.func @transform_7(%arg0: i32) -> (i32, i32) {
    %c0_i32 = arith.constant 0 : i32
    %c0_i32_0 = arith.constant 0 : i32
    %c0_i32_1 = arith.constant 0 : i32
    return %c0_i32, %c0_i32_0 : i32, i32
  }
  func.func @transform_8(%arg0: i32) -> (i32, i32) {
    %c0_i32 = arith.constant 0 : i32
    %c0_i32_0 = arith.constant 0 : i32
    %c0_i32_1 = arith.constant 0 : i32
    return %c0_i32, %c0_i32_0 : i32, i32
  }
  func.func @transform_9(%arg0: i32) -> (i32, i32) {
    %c0_i32 = arith.constant 0 : i32
    %c0_i32_0 = arith.constant 0 : i32
    return %arg0, %c0_i32 : i32, i32
  }
}

</mosaic_0001>

<llo_original>
// kernel: mycdm_msa_forward.1
$region0: #{mycdm_msa_forward.1}
  #allocation0 [shape = 'u32[]', space=smem, size = 0x4, offset = 0x4, fixed_abs, tag = 'smem constant byte address 0x4 - core index']
  #allocation1 [shape = 'u32[144,128]{1,0:T(1,128)}', space=vmem, size = 0x12000, scoped, tag = 'internal scratch']
  #allocation2 [shape = 'f32[1,1]{1,0:T(1,128)S(1)}', space=vmem, size = 0x200, scoped, tag = 'scoped memory for mycdm_msa_forward.1']
  %s0 = inlined_call_operand.vmem [shape: f32[8,32], index: 0, kind: input, shape index: {}]
  %s1 = inlined_call_operand.vmem [shape: f32[8,32], index: 1, kind: input, shape index: {}]
  %s2 = inlined_call_operand.vmem [shape: bf16[32,64], index: 2, kind: input, shape index: {}]
  %s3 = inlined_call_operand.vmem [shape: bf16[32,64], index: 3, kind: input, shape index: {}]
  %s4 = inlined_call_operand.vmem [shape: f32[1,64], index: 4, kind: input, shape index: {}]
  %s5 = inlined_call_operand.vmem [shape: bf16[64,32], index: 5, kind: input, shape index: {}]
  %s6 = inlined_call_operand.vmem [shape: f32[1,32], index: 6, kind: input, shape index: {}]
  %s7 = inlined_call_operand.vmem [shape: f32[1,32], index: 7, kind: input, shape index: {}]
  %s8 = inlined_call_operand.<no memory space> [shape: f32[1,1], index: 8, kind: input, shape index: {}]
  %s9 = inlined_call_operand.vmem [shape: f32[8,1], index: 9, kind: output, shape index: {}]
  %s10 = sld [smem:[#allocation0]]
  $region80: #{mycdm_msa_forward.1} parent=0
    _
  %s12 = ssub.s32 1, %s10
  %s13 = scalar_select 0, %s12, %s10
  %v14 = vstv %s8
  %15 = vst [vmem:[#allocation2] sm:$0x1] %v14
  $region1: #{mycdm_msa_forward.1} parent=0
    #allocation3 [shape = 'u8[8192]{0}', space=vmem, size = 0x2000, scoped, tag = 'output window, operand 0, single buffered']
    // Predicated region
    $region2: #{mycdm_msa_forward.1} parent=1 // pred_check
      _
    $region3: #{mycdm_msa_forward.1} parent=1 // pred_check_branch
      %17 = sbr.rel (0) target = $region5
    $region4: #{mycdm_msa_forward.1} parent=1 // pred_region
      _
    $region5: #{mycdm_msa_forward.1} parent=1 // pred_fallthru
      _
    // Predicated region
    $region6: #{mycdm_msa_forward.1} parent=1 // pred_check
      _
    $region7: #{mycdm_msa_forward.1} parent=1 // pred_check_branch
      %19 = sbr.rel (0) target = $region9
    $region8: #{mycdm_msa_forward.1} parent=1 // pred_region
      _
    $region9: #{mycdm_msa_forward.1} parent=1 // pred_fallthru
      _
    // Predicated region
    $region10: #{mycdm_msa_forward.1} parent=1 // pred_check
      _
    $region11: #{mycdm_msa_forward.1} parent=1 // pred_check_branch
      %21 = sbr.rel (0) target = $region13
    $region12: #{mycdm_msa_forward.1} parent=1 // pred_region
      _
    $region13: #{mycdm_msa_forward.1} parent=1 // pred_fallthru
      _
    // Predicated region
    $region14: #{mycdm_msa_forward.1} parent=1 // pred_check
      _
    $region15: #{mycdm_msa_forward.1} parent=1 // pred_check_branch
      %23 = sbr.rel (0) target = $region17
    $region16: #{mycdm_msa_forward.1} parent=1 // pred_region
      _
    $region17: #{mycdm_msa_forward.1} parent=1 // pred_fallthru
      _
    // Predicated region
    $region18: #{mycdm_msa_forward.1} parent=1 // pred_check
      _
    $region19: #{mycdm_msa_forward.1} parent=1 // pred_check_branch
      %25 = sbr.rel (0) target = $region21
    $region20: #{mycdm_msa_forward.1} parent=1 // pred_region
      _
    $region21: #{mycdm_msa_forward.1} parent=1 // pred_fallthru
      _
    // Predicated region
    $region22: #{mycdm_msa_forward.1} parent=1 // pred_check
      _
    $region23: #{mycdm_msa_forward.1} parent=1 // pred_check_branch
      %27 = sbr.rel (0) target = $region25
    $region24: #{mycdm_msa_forward.1} parent=1 // pred_region
      _
    $region25: #{mycdm_msa_forward.1} parent=1 // pred_fallthru
      _
    // Predicated region
    $region26: #{mycdm_msa_forward.1} parent=1 // pred_check
      _
    $region27: #{mycdm_msa_forward.1} parent=1 // pred_check_branch
      %29 = sbr.rel (0) target = $region29
    $region28: #{mycdm_msa_forward.1} parent=1 // pred_region
      _
    $region29: #{mycdm_msa_forward.1} parent=1 // pred_fallthru
      _
    // Predicated region
    $region30: #{mycdm_msa_forward.1} parent=1 // pred_check
      _
    $region31: #{mycdm_msa_forward.1} parent=1 // pred_check_branch
      %31 = sbr.rel (0) target = $region33
    $region32: #{mycdm_msa_forward.1} parent=1 // pred_region
      _
    $region33: #{mycdm_msa_forward.1} parent=1 // pred_fallthru
      _
    // Predicated region
    $region34: #{mycdm_msa_forward.1} parent=1 // pred_check
      _
    $region35: #{mycdm_msa_forward.1} parent=1 // pred_check_branch
      %33 = sbr.rel (0) target = $region37
    $region36: #{mycdm_msa_forward.1} parent=1 // pred_region
      _
    $region37: #{mycdm_msa_forward.1} parent=1 // pred_fallthru
      _
    %v35 = vld [vmem:[%s0] sm:$0xff]
    %v36 = vld [vmem:[%s0 + $0x8] sm:$0xff]
    %v37 = vpack.c.bf16 %v36, %v35
    %v38 = vld [vmem:[%s1] sm:$0xff]
    %v39 = vld [vmem:[%s1 + $0x8] sm:$0xff]
    %v40 = vpack.c.bf16 %v39, %v38
    %v41 = vld [vmem:[%s2] sm:$0xf]
    %v42 = vld [vmem:[%s2 + $0x4] sm:$0xf]
    %v43 = vld [vmem:[%s2 + $0x8] sm:$0xf]
    %v44 = vld [vmem:[%s2 + $0xc] sm:$0xf]
    %v45 = vld [vmem:[%s3] sm:$0xf]
    %v46 = vld [vmem:[%s3 + $0x4] sm:$0xf]
    %v47 = vld [vmem:[%s3 + $0x8] sm:$0xf]
    %v48 = vld [vmem:[%s3 + $0xc] sm:$0xf]
    %v53 = vunpack.c.l.b16 %v45
    %v54 = vunpack.c.l.b16 %v46
    %v55 = vunpack.c.l.b16 %v47
    %v56 = vunpack.c.l.b16 %v48
    %v57 = vpack.c.b16 %v54, %v53
    %v58 = vpack.c.b16 %v56, %v55
    %vm61 = vcmask 261120
    %v63 = vsel %vm61, %v40, 0
    %65 = vmatprep.subr.bf16.mxu0 0
    %66 = vmatpush1.bf16.msra.mxu0 %v57
    %67 = vmatprep.subr.bf16.mxu0 0
    %68 = vmatpush1.bf16.msra.mxu0 %v58
    %69 = vmatprep.subr.bf16.mxu0 0
    %70 = vmatpush1.bf16.msra.mxu0 0
    %71 = vmatprep.subr.bf16.mxu0 0
    %72 = vmatpush1.bf16.msra.mxu0 0
    %73 = vmatprep.subr.bf16.mxu0 0
    %74 = vmatpush1.bf16.msra.mxu0 0
    %75 = vmatprep.subr.bf16.mxu0 0
    %76 = vmatpush1.bf16.msra.mxu0 0
    %77 = vmatprep.subr.bf16.mxu0 0
    %78 = vmatpush1.bf16.msra.mxu0 0
    %79 = vmatprep.subr.bf16.mxu0 0
    %80 = vmatpush1.bf16.msra.mxu0 0
    %81 = vmatprep.subr.bf16.mxu0 0
    %82 = vmatpush1.bf16.msra.mxu0 0
    %83 = vmatprep.subr.bf16.mxu0 0
    %84 = vmatpush1.bf16.msra.mxu0 0
    %85 = vmatprep.subr.bf16.mxu0 0
    %86 = vmatpush1.bf16.msra.mxu0 0
    %87 = vmatprep.subr.bf16.mxu0 0
    %88 = vmatpush1.bf16.msra.mxu0 0
    %89 = vmatprep.subr.bf16.mxu0 0
    %90 = vmatpush1.bf16.msra.mxu0 0
    %91 = vmatprep.subr.bf16.mxu0 0
    %92 = vmatpush1.bf16.msra.mxu0 0
    %93 = vmatprep.subr.bf16.mxu0 0
    %94 = vmatpush1.bf16.msra.mxu0 0
    %95 = vmatprep.subr.bf16.mxu0 0
    %96 = vmatpush1.bf16.msra.mxu0 0
    %97 = vmatprep.mubr.bf16.mxu0 0
    %98 = vmatmul.mubr.bf16.gmra.mrb[0].mxu0 %v63
    %v99 = vpop.f32.mrb[0].mxu0
    %v100 = vadd.f32 0.0, %v99
    %v101 = vpop.f32.mrb[0].mxu0
    %v102 = vpop.f32.mrb[0].mxu0
    %v103 = vadd.f32 0.0, %v102
    %v104 = vpop.f32.mrb[0].mxu0
    %105 = vdwg.mxu0
    %v110 = vunpack.c.l.b16 %v41
    %v111 = vunpack.c.l.b16 %v42
    %v112 = vunpack.c.l.b16 %v43
    %v113 = vunpack.c.l.b16 %v44
    %v114 = vpack.c.b16 %v111, %v110
    %v115 = vpack.c.b16 %v113, %v112
    %v119 = vsel %vm61, %v37, 0
    %121 = vmatprep.subr.bf16.mxu0 0
    %122 = vmatpush1.bf16.msra.mxu0 %v114
    %123 = vmatprep.subr.bf16.mxu0 0
    %124 = vmatpush1.bf16.msra.mxu0 %v115
    %125 = vmatprep.subr.bf16.mxu0 0
    %126 = vmatpush1.bf16.msra.mxu0 0
    %127 = vmatprep.subr.bf16.mxu0 0
    %128 = vmatpush1.bf16.msra.mxu0 0
    %129 = vmatprep.subr.bf16.mxu0 0
    %130 = vmatpush1.bf16.msra.mxu0 0
    %131 = vmatprep.subr.bf16.mxu0 0
    %132 = vmatpush1.bf16.msra.mxu0 0
    %133 = vmatprep.subr.bf16.mxu0 0
    %134 = vmatpush1.bf16.msra.mxu0 0
    %135 = vmatprep.subr.bf16.mxu0 0
    %136 = vmatpush1.bf16.msra.mxu0 0
    %137 = vmatprep.subr.bf16.mxu0 0
    %138 = vmatpush1.bf16.msra.mxu0 0
    %139 = vmatprep.subr.bf16.mxu0 0
    %140 = vmatpush1.bf16.msra.mxu0 0
    %141 = vmatprep.subr.bf16.mxu0 0
    %142 = vmatpush1.bf16.msra.mxu0 0
    %143 = vmatprep.subr.bf16.mxu0 0
    %144 = vmatpush1.bf16.msra.mxu0 0
    %145 = vmatprep.subr.bf16.mxu0 0
    %146 = vmatpush1.bf16.msra.mxu0 0
    %147 = vmatprep.subr.bf16.mxu0 0
    %148 = vmatpush1.bf16.msra.mxu0 0
    %149 = vmatprep.subr.bf16.mxu0 0
    %150 = vmatpush1.bf16.msra.mxu0 0
    %151 = vmatprep.subr.bf16.mxu0 0
    %152 = vmatpush1.bf16.msra.mxu0 0
    %153 = vmatprep.mubr.bf16.mxu0 0
    %154 = vmatmul.mubr.bf16.gmra.mrb[0].mxu0 %v119
    %v155 = vpop.f32.mrb[0].mxu0
    %v156 = vadd.f32 %v100, %v155
    %v157 = vpop.f32.mrb[0].mxu0
    %v158 = vpop.f32.mrb[0].mxu0
    %v159 = vadd.f32 %v103, %v158
    %v160 = vpop.f32.mrb[0].mxu0
    %161 = vdwg.mxu0
    %v162 = vld [vmem:[%s4] sm:$0x1]
    %v164 = vlaneseq
    %v165 = vshrl.u32 %v164, 7
    %v166 = vsub.s32 0, %v165
    %v167 = vrot.slane %v162, %v166
    %v169 = vadd.f32 %v156, %v167
    %v170 = vadd.f32 %v159, %v167
    %v171 = vxor.u32 %v169, 2147483648
    %v172 = vxor.u32 %v170, 2147483648
    %v173 = vmul.f32 %v171, 1.442695
    %v174 = vpow.pop %v173
    %v175 = vmul.f32 %v172, 1.442695
    %v176 = vpow.pop %v175
    %v177 = vadd.f32 %v174, 1.0
    %v178 = vadd.f32 %v176, 1.0
    %v179 = vrcp.pop %v177
    %v180 = vmul.f32 1.0, %v179
    %v181 = vrcp.pop %v178
    %v182 = vmul.f32 1.0, %v181
    %v183 = vpack.c.bf16 %v182, %v180
    %v184 = vld [vmem:[%s5] sm:$0xf]
    %v185 = vld [vmem:[%s5 + $0x4] sm:$0xf]
    %v186 = vld [vmem:[%s5 + $0x8] sm:$0xf]
    %v187 = vld [vmem:[%s5 + $0xc] sm:$0xf]
    %v188 = vld [vmem:[%s5 + $0x10] sm:$0xf]
    %v189 = vld [vmem:[%s5 + $0x14] sm:$0xf]
    %v190 = vld [vmem:[%s5 + $0x18] sm:$0xf]
    %v191 = vld [vmem:[%s5 + $0x1c] sm:$0xf]
    %v192 = vld [vmem:[%s6] sm:$0x1]
    %v194 = vlaneseq
    %v195 = vshrl.u32 %v194, 7
    %v196 = vsub.s32 0, %v195
    %v197 = vrot.slane %v192, %v196
    %v207 = vunpack.c.l.b16 %v184
    %v208 = vunpack.c.l.b16 %v185
    %v209 = vunpack.c.l.b16 %v186
    %v210 = vunpack.c.l.b16 %v187
    %v211 = vunpack.c.l.b16 %v188
    %v212 = vunpack.c.l.b16 %v189
    %v213 = vunpack.c.l.b16 %v190
    %v214 = vunpack.c.l.b16 %v191
    %v215 = vpack.c.b16 %v208, %v207
    %v216 = vpack.c.b16 %v210, %v209
    %v217 = vpack.c.b16 %v212, %v211
    %v218 = vpack.c.b16 %v214, %v213
    %vm223 = vcmask 523264
    %v225 = vsel %vm223, %v183, 0
    %227 = vmatprep.subr.bf16.mxu0 0
    %228 = vmatpush1.bf16.msra.mxu0 %v215
    %229 = vmatprep.subr.bf16.mxu0 0
    %230 = vmatpush1.bf16.msra.mxu0 %v216
    %231 = vmatprep.subr.bf16.mxu0 0
    %232 = vmatpush1.bf16.msra.mxu0 %v217
    %233 = vmatprep.subr.bf16.mxu0 0
    %234 = vmatpush1.bf16.msra.mxu0 %v218
    %235 = vmatprep.subr.bf16.mxu0 0
    %236 = vmatpush1.bf16.msra.mxu0 0
    %237 = vmatprep.subr.bf16.mxu0 0
    %238 = vmatpush1.bf16.msra.mxu0 0
    %239 = vmatprep.subr.bf16.mxu0 0
    %240 = vmatpush1.bf16.msra.mxu0 0
    %241 = vmatprep.subr.bf16.mxu0 0
    %242 = vmatpush1.bf16.msra.mxu0 0
    %243 = vmatprep.subr.bf16.mxu0 0
    %244 = vmatpush1.bf16.msra.mxu0 0
    %245 = vmatprep.subr.bf16.mxu0 0
    %246 = vmatpush1.bf16.msra.mxu0 0
    %247 = vmatprep.subr.bf16.mxu0 0
    %248 = vmatpush1.bf16.msra.mxu0 0
    %249 = vmatprep.subr.bf16.mxu0 0
    %250 = vmatpush1.bf16.msra.mxu0 0
    %251 = vmatprep.subr.bf16.mxu0 0
    %252 = vmatpush1.bf16.msra.mxu0 0
    %253 = vmatprep.subr.bf16.mxu0 0
    %254 = vmatpush1.bf16.msra.mxu0 0
    %255 = vmatprep.subr.bf16.mxu0 0
    %256 = vmatpush1.bf16.msra.mxu0 0
    %257 = vmatprep.subr.bf16.mxu0 0
    %258 = vmatpush1.bf16.msra.mxu0 0
    %259 = vmatprep.mubr.bf16.mxu0 0
    %260 = vmatmul.mubr.bf16.gmra.mrb[0].mxu0 %v225
    %v261 = vpop.f32.mrb[0].mxu0
    %v262 = vadd.f32 %v197, %v261
    %v263 = vpop.f32.mrb[0].mxu0
    %v264 = vpop.f32.mrb[0].mxu0
    %v265 = vadd.f32 %v197, %v264
    %v266 = vpop.f32.mrb[0].mxu0
    %267 = vdwg.mxu0
    %v268 = vxor.u32 %v262, 2147483648
    %v269 = vxor.u32 %v265, 2147483648
    %v270 = vmul.f32 %v268, 1.442695
    %v271 = vpow.pop %v270
    %v272 = vmul.f32 %v269, 1.442695
    %v273 = vpow.pop %v272
    %v274 = vadd.f32 %v271, 1.0
    %v275 = vadd.f32 %v273, 1.0
    %v276 = vrcp.pop %v274
    %v277 = vmul.f32 1.0, %v276
    %v278 = vrcp.pop %v275
    %v279 = vmul.f32 1.0, %v278
    %v280 = vld [vmem:[%s7] sm:$0x1]
    %v282 = vlaneseq
    %v283 = vshrl.u32 %v282, 7
    %v284 = vsub.s32 0, %v283
    %v285 = vrot.slane %v280, %v284
    %v287 = vmul.f32 %v277, %v285
    %v288 = vmul.f32 %v279, %v285
    %v289 = vsel %vm61, %v287, 0.0
    %290 = vadd.xlane.f32.xlu0 %v289
    %v291 = vpop.xlane.xlu0 %290
    %v292 = vsel %vm61, %v288, 0.0
    %293 = vadd.xlane.f32.xlu0 %v292
    %v294 = vpop.xlane.xlu0 %293
    %v295 = vld [vmem:[#allocation2] sm:$0x1]
    %v297 = vlaneseq
    %v298 = vshrl.u32 %v297, 7
    %v299 = vsub.s32 0, %v298
    %v300 = vrot.slane %v295, %v299
    %v302 = vadd.f32 %v291, %v300
    %v303 = vadd.f32 %v294, %v300
    %v304 = vxor.u32 %v302, 2147483648
    %v305 = vxor.u32 %v303, 2147483648
    %v306 = vmul.f32 %v304, 1.442695
    %v307 = vpow.pop %v306
    %v308 = vmul.f32 %v305, 1.442695
    %v309 = vpow.pop %v308
    %v310 = vadd.f32 %v307, 1.0
    %v311 = vadd.f32 %v309, 1.0
    %v312 = vrcp.pop %v310
    %v313 = vmul.f32 1.0, %v312
    %v314 = vrcp.pop %v311
    %v315 = vmul.f32 1.0, %v314
    %vm316 = vcmask 7168
    %317 = vst.msk [vmem:[#allocation3] sm:$0xff] %vm316, %v313
    %318 = vst.msk [vmem:[#allocation3 + $0x8] sm:$0xff] %vm316, %v315
    // Predicated region
    $region38: #{mycdm_msa_forward.1} parent=1 // pred_check
      _
    $region39: #{mycdm_msa_forward.1} parent=1 // pred_check_branch
      %320 = sbr.rel (0) target = $region41
    $region40: #{mycdm_msa_forward.1} parent=1 // pred_region
      // Predicated region
      $region42: #{mycdm_msa_forward.1} parent=40 // pred_check
        _
      $region43: #{mycdm_msa_forward.1} parent=40 // pred_check_branch
        %322 = sbr.rel (0) target = $region45
      $region44: #{mycdm_msa_forward.1} parent=40 // pred_region
        // Predicated region
        $region46: #{mycdm_msa_forward.1} parent=44 // pred_check
          _
        $region47: #{mycdm_msa_forward.1} parent=44 // pred_check_branch
          %324 = sbr.rel (0) target = $region49
        $region48: #{mycdm_msa_forward.1} parent=44 // pred_region
          // Predicated region
          $region61: #{mycdm_msa_forward.1} parent=48 // pred_check
            _
          $region62: #{mycdm_msa_forward.1} parent=48 // pred_check_branch
            %339 = sbr.rel (0) target = $region64
          $region63: #{mycdm_msa_forward.1} parent=48 // pred_region
            loop: start=0, step=1, limit=1
            $region65: #{mycdm_msa_forward.1} parent=63 // loop_pre_header
              _
            $region66: #{mycdm_msa_forward.1} parent=63 // loop_header
              %s341 = sphi 0, %s345
              %p342 = scmp.ge.s32.totalorder %s341, 1
              %s346 = sphi [#allocation3], [#allocation3]
              %s347 = sphi %s9, %s9
            $region67: #{mycdm_msa_forward.1} parent=63 // loop_header_branch
              %344 = sbr.rel (%p342) target = $region71
            $region68: #{mycdm_msa_forward.1} parent=63 // loop_body
              %v348 = vld [vmem:[%s346] sm:$0xff]
              %349 = vst [vmem:[%s347] sm:$0xff] %v348
            $region69: #{mycdm_msa_forward.1} parent=63 // loop_footer
              %s345 = sadd.s32 1, %s341
            $region70: #{mycdm_msa_forward.1} parent=63 // loop_footer_branch
              %340 = sbr.rel target = $region66
            $region71: #{mycdm_msa_forward.1} parent=63 // loop_exit
              _
          $region64: #{mycdm_msa_forward.1} parent=48 // pred_fallthru
            _
          // Predicated region
          $region72: #{mycdm_msa_forward.1} parent=48 // pred_check
            _
          $region73: #{mycdm_msa_forward.1} parent=48 // pred_check_branch
            %351 = sbr.rel target = $region75
          $region74: #{mycdm_msa_forward.1} parent=48 // pred_region
            _
          $region75: #{mycdm_msa_forward.1} parent=48 // pred_fallthru
            _
        $region49: #{mycdm_msa_forward.1} parent=44 // pred_fallthru
          _
        // Predicated region
        $region50: #{mycdm_msa_forward.1} parent=44 // pred_check
          _
        $region51: #{mycdm_msa_forward.1} parent=44 // pred_check_branch
          %326 = sbr.rel target = $region53
        $region52: #{mycdm_msa_forward.1} parent=44 // pred_region
          loop: start=0, step=1, limit=1
          $region54: #{mycdm_msa_forward.1} parent=52 // loop_pre_header
            _
          $region55: #{mycdm_msa_forward.1} parent=52 // loop_header
            %s329 = sphi 0, %s333
            %p330 = scmp.ge.s32.totalorder %s329, 1
            %s334 = sphi [#allocation3], [#allocation3]
            %s335 = sphi %s9, %s9
          $region56: #{mycdm_msa_forward.1} parent=52 // loop_header_branch
            %332 = sbr.rel (%p330) target = $region60
          $region57: #{mycdm_msa_forward.1} parent=52 // loop_body
            %v336 = vld [vmem:[%s334] sm:$0xff]
            %337 = vst [vmem:[%s335] sm:$0xff] %v336
          $region58: #{mycdm_msa_forward.1} parent=52 // loop_footer
            %s333 = sadd.s32 1, %s329
          $region59: #{mycdm_msa_forward.1} parent=52 // loop_footer_branch
            %328 = sbr.rel target = $region55
          $region60: #{mycdm_msa_forward.1} parent=52 // loop_exit
            _
        $region53: #{mycdm_msa_forward.1} parent=44 // pred_fallthru
          _
      $region45: #{mycdm_msa_forward.1} parent=40 // pred_fallthru
        _
      %352 = vnop
    $region41: #{mycdm_msa_forward.1} parent=1 // pred_fallthru
      _
    // Predicated region
    $region76: #{mycdm_msa_forward.1} parent=1 // pred_check
      _
    $region77: #{mycdm_msa_forward.1} parent=1 // pred_check_branch
      %354 = sbr.rel (0) target = $region79
    $region78: #{mycdm_msa_forward.1} parent=1 // pred_region
      _
    $region79: #{mycdm_msa_forward.1} parent=1 // pred_fallthru
      _

</llo_original>
